<compile_context>
chip_gen: v7x
topology: tpu7x:2x2x1
jax: 0.10.0
libtpu: 0.0.40
codegen_flags: <defaults>
</compile_context>

<pallas_src>
import jax
import jax.numpy as jnp
from jax.experimental import pallas as pl
from jax.experimental.pallas import tpu as pltpu


def _round_up(n, m):
    return ((n + m - 1) // m) * m


def _tpu_vmem_capacity_bytes():
    """Best-effort physical-VMEM query; conservative (v7x-sized) fallback."""
    try:
        info = pltpu.get_tpu_info()
        cap = int(getattr(info, "vmem_capacity_bytes", 0) or 0)
        if cap > 0:
            return cap
    except Exception:
        pass
    return 64 * 1024 * 1024


def _pick_h_slab(h_p, max_th):
    """Largest multiple of 128 that exactly divides h_p and is <= max_th.

    Keeping th an exact divisor of the padded hidden dim guarantees no ragged
    (garbage-filled) weight slab ever contaminates the reduction.
    """
    n = h_p // 128
    best = 1
    for d in range(1, n + 1):
        if n % d == 0 and d * 128 <= max_th:
            best = d
    return best * 128


def _make_ffn_kernel(residual_mode):
    """residual_mode: 'x' (residual == input, reuse x tile), 'sep' (separate
    residual tensor), or 'none' (no residual add)."""

    def kernel(x_ref, w1_ref, w2_ref, *rest):
        if residual_mode == "sep":
            res_ref, o_ref, acc_ref = rest
        else:
            res_ref = x_ref if residual_mode == "x" else None
            o_ref, acc_ref = rest

        j = pl.program_id(1)  # hidden-dim (reduction) axis

        @pl.when(j == 0)
        def _():
            # Fuse the residual into the accumulator init (saves a full
            # (tm, E_p) read + add in the finalize step).
            if res_ref is not None:
                acc_ref[...] = res_ref[...].astype(jnp.float32)
            else:
                acc_ref[...] = jnp.zeros_like(acc_ref)

        # First matmul + ReLU on this H-slab.  Native dtype operands; the MXU
        # accumulates in f32 via preferred_element_type.
        h = jnp.dot(x_ref[...], w1_ref[...], preferred_element_type=jnp.float32)
        h = jnp.maximum(h, 0.0)

        # Second matmul: accumulate this H-slab's contribution in f32.
        acc_ref[...] += jnp.dot(h.astype(w2_ref.dtype), w2_ref[...],
                                preferred_element_type=jnp.float32)

        @pl.when(j == pl.num_programs(1) - 1)
        def _():
            o_ref[...] = acc_ref[...].astype(o_ref.dtype)

    return kernel


def prepare_ffn_weights(w1, w2):
    """Pad FFN weights to lane-dense (multiples of 128) shapes ONCE at
    parameter-load time, so ffn_pallas never re-pads them per call.
    Zero padding is numerically inert for this FFN."""
    E, H = w1.shape
    assert w2.shape == (H, E), "weight shape mismatch"
    E_p, H_p = _round_up(E, 128), _round_up(H, 128)
    if (E_p, H_p) != (E, H):
        w1 = jnp.pad(w1, ((0, E_p - E), (0, H_p - H)))
        w2 = jnp.pad(w2, ((0, H_p - H), (0, E_p - E)))
    return w1, w2


def ffn_pallas(x, w1, w2, residual=None, add_residual=True, *,
               tile_m=None, tile_h=None):
    """out = residual + relu(x @ w1) @ w2   (dropout p = 0.0 -> identity).

    x: (B, S, E).  w1: (E, H), w2: (H, E) (transposed vs torch.nn.Linear);
    weights may already be padded by prepare_ffn_weights().
    tile_m / tile_h = None -> generation-aware auto tiling.
    """
    B, S, E = x.shape
    M = B * S
    itemsize = jnp.dtype(x.dtype).itemsize
    E_p = _round_up(E, 128)

    # Accept weights already prepared by prepare_ffn_weights (preferred),
    # otherwise pad here as a per-call fallback.
    if (w1.shape[0] == E_p and w1.shape[1] % 128 == 0
            and w2.shape == (w1.shape[1], E_p)):
        w1p, w2p = w1, w2
    else:
        assert w1.shape[0] == E and w2.shape == (w1.shape[1], E), "weight shape mismatch"
        w1p, w2p = prepare_ffn_weights(w1, w2)
    H_p = w1p.shape[1]
    w_itemsize = jnp.dtype(w1p.dtype).itemsize

    if not add_residual:
        residual_mode = "none"
    elif residual is None:
        residual_mode = "x"      # reuse the x tile -> no duplicate residual DMA
    else:
        assert residual.shape == x.shape
        residual_mode = "sep"
    n_rows_in = 1 + (residual_mode == "sep")

    # ---- generation-aware VMEM budget & tile defaults ----------------------
    vmem_cap = _tpu_vmem_capacity_bytes()
    big_vmem = vmem_cap >= 128 * 1024 * 1024              # v5e / v6e
    vmem_budget = (100 * 1024 * 1024 if big_vmem
                   else min(vmem_cap - 8 * 1024 * 1024, 56 * 1024 * 1024))
    two_core = not big_vmem                               # v7x heuristic (2 TCs)

    sub = 8 * max(1, 4 // itemsize)                       # 8 f32 / 16 bf16 / 32 int8
    auto_tm = tile_m is None
    if auto_tm:
        tile_m = 512 if big_vmem else 256
    auto_th = tile_h is None

    tm = min(_round_up(tile_m, sub), _round_up(M, sub))
    # v7x: make sure both TensorCores get row tiles on small-M shapes.
    if auto_tm and two_core and M > sub and pl.cdiv(M, tm) < 2:
        tm = max(sub, _round_up(pl.cdiv(M, 2), sub))

    def ws_bytes(tm_, th_):
        weights = 2 * 2 * E_p * th_ * w_itemsize            # W1+W2 slabs, dbl-buffered
        acts = 2 * (n_rows_in + 1) * tm_ * E_p * itemsize   # x (+res) + out tiles
        acc = tm_ * E_p * 4                                 # f32 accumulator scratch
        hid = tm_ * th_ * 4                                 # relu(x @ w1) intermediate
        return weights + acts + acc + hid

    # Prefer fully VMEM-resident weights (grid_h == 1): constant block index
    # -> Pallas streams W1/W2 from HBM exactly once for the whole call.
    if auto_th and ws_bytes(tm, H_p) <= vmem_budget:
        th = H_p
    else:
        if auto_th:
            desired = min(H_p, 1024 if big_vmem else 256)
        else:
            desired = _round_up(tile_h, 128)
        th = _pick_h_slab(H_p, max(128, desired))
        # Auto-shrink tiles instead of clamping vmem_limit below the need.
        while ws_bytes(tm, th) > vmem_budget and th > 128:
            th = _pick_h_slab(H_p, th // 2)
        while ws_bytes(tm, th) > vmem_budget and tm > sub:
            tm = max(sub, _round_up(tm // 2, sub))

    grid_m = pl.cdiv(M, tm)
    grid_h = H_p // th          # exact by construction of th

    ws = ws_bytes(tm, th)
    vmem_limit = min(vmem_budget, max(32 * 1024 * 1024, int(1.25 * ws) + (2 << 20)))

    # ---- inputs: pad only E (lane density / correctness), never M ----------
    x2 = x.reshape(M, E)
    if E_p != E:
        x2 = jnp.pad(x2, ((0, 0), (0, E_p - E)))

    row_spec = pl.BlockSpec((tm, E_p), lambda i, j: (i, 0))
    if grid_h == 1:
        # Resident weights: constant block index -> DMA'd once, kept in VMEM.
        w1_spec = pl.BlockSpec((E_p, H_p), lambda i, j: (0, 0))
        w2_spec = pl.BlockSpec((H_p, E_p), lambda i, j: (0, 0))
    else:
        w1_spec = pl.BlockSpec((E_p, th), lambda i, j: (0, j))
        w2_spec = pl.BlockSpec((th, E_p), lambda i, j: (j, 0))

    in_specs = [row_spec, w1_spec, w2_spec]
    inputs = [x2, w1p, w2p]
    if residual_mode == "sep":
        r2 = residual.reshape(M, E)
        if E_p != E:
            r2 = jnp.pad(r2, ((0, 0), (0, E_p - E)))
        in_specs.append(row_spec)
        inputs.append(r2)

    weight_bytes = (1 if grid_h == 1 else grid_m) * 2 * E_p * H_p * w_itemsize
    cost = pl.CostEstimate(
        flops=4 * M * E_p * H_p,          # two matmuls: 2*M*E*H + 2*M*H*E
        transcendentals=0,
        bytes_accessed=int(itemsize * (n_rows_in + 1) * M * E_p + weight_bytes))

    out2 = pl.pallas_call(
        _make_ffn_kernel(residual_mode),
        out_shape=jax.ShapeDtypeStruct((M, E_p), x.dtype),
        grid_spec=pltpu.PrefetchScalarGridSpec(
            num_scalar_prefetch=0,
            grid=(grid_m, grid_h),                 # rows parallel, H reduction last
            in_specs=in_specs,
            out_specs=row_spec,
            scratch_shapes=[pltpu.VMEM((tm, E_p), jnp.float32)],
        ),
        compiler_params=pltpu.CompilerParams(
            dimension_semantics=("parallel", "arbitrary"),
            vmem_limit_bytes=int(vmem_limit)),
        cost_estimate=cost,
    )(*inputs)

    out = out2[:, :E] if E_p != E else out2
    return out.reshape(B, S, E)


def _ref_ffn(x, w1, w2, residual):
    hp = jax.lax.Precision.HIGHEST
    h = jnp.maximum(jnp.einsum("bse,eh->bsh", x, w1, precision=hp), 0.0)
    o = jnp.einsum("bsh,he->bse", h, w2, precision=hp)
    return o if residual is None else residual + o


if __name__ == "__main__":
    key = jax.random.PRNGKey(0)
    k = jax.random.split(key, 8)

    # ---- Config A: small FFN, weights fully VMEM-resident (grid_h == 1) ----
    B, S, E, H = 2, 8, 32, 64
    x = jax.random.normal(k[0], (B, S, E), dtype=jnp.float32)
    w1 = jax.random.normal(k[1], (E, H), dtype=jnp.float32) * (1.0 / jnp.sqrt(E))
    w2 = jax.random.normal(k[2], (H, E), dtype=jnp.float32) * (1.0 / jnp.sqrt(H))
    res = jax.random.normal(k[3], (B, S, E), dtype=jnp.float32)

    # Pad the weights ONCE (load time), not per call.
    w1p, w2p = prepare_ffn_weights(w1, w2)

    # residual = x path (reuses the x tile; no duplicate residual DMA)
    out = jax.block_until_ready(ffn_pallas(x, w1p, w2p))
    assert jnp.allclose(out, _ref_ffn(x, w1, w2, x), atol=2e-3, rtol=2e-3), \
        "mismatch (residual=x)"

    # explicit residual path
    out_sep = jax.block_until_ready(ffn_pallas(x, w1p, w2p, residual=res))
    assert jnp.allclose(out_sep, _ref_ffn(x, w1, w2, res), atol=2e-3, rtol=2e-3), \
        "mismatch (residual=sep)"

    # no-residual path (add_residual=False)
    out_nr = jax.block_until_ready(ffn_pallas(x, w1p, w2p, add_residual=False))
    assert jnp.allclose(out_nr, _ref_ffn(x, w1, w2, None), atol=2e-3, rtol=2e-3), \
        "mismatch (no residual)"

    # ---- Config B: streamed weight slabs (grid_h > 1) + ragged final M tile -
    B2, S2, E2, H2 = 2, 10, 32, 256       # M = 20, tile_m = 16 -> partial tail block
    x_b = jax.random.normal(k[4], (B2, S2, E2), dtype=jnp.float32)
    w1_b = jax.random.normal(k[5], (E2, H2), dtype=jnp.float32) * (1.0 / jnp.sqrt(E2))
    w2_b = jax.random.normal(k[6], (H2, E2), dtype=jnp.float32) * (1.0 / jnp.sqrt(H2))
    out_b = jax.block_until_ready(
        ffn_pallas(x_b, w1_b, w2_b, tile_m=16, tile_h=128))
    assert jnp.allclose(out_b, _ref_ffn(x_b, w1_b, w2_b, x_b), atol=2e-3, rtol=2e-3), \
        "mismatch (streamed weights / ragged M)"

    print("KERNEL_OK")
</pallas_src>

<mosaic_0001>
module attributes {stable_mosaic.version = 11 : i64} {
  func.func @kernel(%arg0: i32, %arg1: i32, %arg2: memref<8x128xf32, #tpu.memory_space<vmem>>, %arg3: memref<128x128xf32, #tpu.memory_space<vmem>>, %arg4: memref<128x128xf32, #tpu.memory_space<vmem>>, %arg5: memref<8x128xf32, #tpu.memory_space<vmem>>, %arg6: memref<8x128xf32, #tpu.memory_space<vmem>>) attributes {dimension_semantics = [#tpu.dimension_semantics<parallel>, #tpu.dimension_semantics<arbitrary>], iteration_bounds = array<i64: 2, 1>, scalar_prefetch = 0 : i64, scratch_operands = 1 : i64, tpu.core_type = #tpu.core_type<tc>, window_params = [{transform_indices = @transform_0, window_bounds = array<i64: 8, 128>}, {pipeline_mode = #tpu.pipeline_mode<synchronous>, transform_indices = @transform_1, window_bounds = array<i64: 128, 128>}, {pipeline_mode = #tpu.pipeline_mode<synchronous>, transform_indices = @transform_2, window_bounds = array<i64: 128, 128>}, {transform_indices = @transform_3, window_bounds = array<i64: 8, 128>}]} {
    %c0_i32 = arith.constant 0 : i32
    %0 = arith.cmpi eq, %arg1, %c0_i32 : i32
    %1 = arith.extui %0 : i1 to i32
    %c0_i32_0 = arith.constant 0 : i32
    %2 = arith.cmpi ne, %1, %c0_i32_0 : i32
    scf.if %2 {
      %c0_14 = arith.constant 0 : index
      %c0_15 = arith.constant 0 : index
      %16 = vector.load %arg2[%c0_14, %c0_15] : memref<8x128xf32, #tpu.memory_space<vmem>>, vector<8x128xf32>
      %c0_16 = arith.constant 0 : index
      %c0_17 = arith.constant 0 : index
      %17 = vector.load %arg6[%c0_16, %c0_17] : memref<8x128xf32, #tpu.memory_space<vmem>>, vector<8x128xf32>
      tpu.vector_store %arg6[%c0_16, %c0_17], %16 {strides = array<i32>} : memref<8x128xf32, #tpu.memory_space<vmem>>, vector<8x128xf32>,
    } else {
    }
    %c0 = arith.constant 0 : index
    %c0_1 = arith.constant 0 : index
    %3 = vector.load %arg2[%c0, %c0_1] : memref<8x128xf32, #tpu.memory_space<vmem>>, vector<8x128xf32>
    %c0_2 = arith.constant 0 : index
    %c0_3 = arith.constant 0 : index
    %4 = vector.load %arg3[%c0_2, %c0_3] : memref<128x128xf32, #tpu.memory_space<vmem>>, vector<128x128xf32>
    %cst = arith.constant dense<0.000000e+00> : vector<8x128xf32>
    %5 = tpu.matmul %3, %4, %cst {dimension_numbers = #tpu.dot_dimension_numbers<[1], [0], [0], [1], [0, 0, 1, 1], [], []>} : vector<8x128xf32>, vector<128x128xf32>, vector<8x128xf32> -> vector<8x128xf32>
    %cst_4 = arith.constant 0.000000e+00 : f32
    %6 = vector.broadcast %cst_4 : f32 to vector<8x128xf32>
    %7 = arith.maximumf %5, %6 : vector<8x128xf32>
    %c0_5 = arith.constant 0 : index
    %c0_6 = arith.constant 0 : index
    %8 = vector.load %arg6[%c0_5, %c0_6] : memref<8x128xf32, #tpu.memory_space<vmem>>, vector<8x128xf32>
    %c0_7 = arith.constant 0 : index
    %c0_8 = arith.constant 0 : index
    %9 = vector.load %arg4[%c0_7, %c0_8] : memref<128x128xf32, #tpu.memory_space<vmem>>, vector<128x128xf32>
    %cst_9 = arith.constant dense<0.000000e+00> : vector<8x128xf32>
    %10 = tpu.matmul %7, %9, %cst_9 {dimension_numbers = #tpu.dot_dimension_numbers<[1], [0], [0], [1], [0, 0, 1, 1], [], []>} : vector<8x128xf32>, vector<128x128xf32>, vector<8x128xf32> -> vector<8x128xf32>
    %11 = arith.addf %8, %10 : vector<8x128xf32>
    %c0_10 = arith.constant 0 : index
    %c0_11 = arith.constant 0 : index
    %12 = vector.load %arg6[%c0_10, %c0_11] : memref<8x128xf32, #tpu.memory_space<vmem>>, vector<8x128xf32>
    tpu.vector_store %arg6[%c0_10, %c0_11], %11 {strides = array<i32>} : memref<8x128xf32, #tpu.memory_space<vmem>>, vector<8x128xf32>,
    %c0_i32_12 = arith.constant 0 : i32
    %13 = arith.cmpi eq, %arg1, %c0_i32_12 : i32
    %14 = arith.extui %13 : i1 to i32
    %c0_i32_13 = arith.constant 0 : i32
    %15 = arith.cmpi ne, %14, %c0_i32_13 : i32
    scf.if %15 {
      %c0_14 = arith.constant 0 : index
      %c0_15 = arith.constant 0 : index
      %16 = vector.load %arg6[%c0_14, %c0_15] : memref<8x128xf32, #tpu.memory_space<vmem>>, vector<8x128xf32>
      %c0_16 = arith.constant 0 : index
      %c0_17 = arith.constant 0 : index
      %17 = vector.load %arg5[%c0_16, %c0_17] : memref<8x128xf32, #tpu.memory_space<vmem>>, vector<8x128xf32>
      tpu.vector_store %arg5[%c0_16, %c0_17], %16 {strides = array<i32>} : memref<8x128xf32, #tpu.memory_space<vmem>>, vector<8x128xf32>,
    } else {
    }
    return
  }
  func.func @transform_0(%arg0: i32, %arg1: i32) -> (i32, i32) {
    %c0_i32 = arith.constant 0 : i32
    %c0_i32_0 = arith.constant 0 : i32
    return %arg0, %c0_i32 : i32, i32
  }
  func.func @transform_1(%arg0: i32, %arg1: i32) -> (i32, i32) {
    %c0_i32 = arith.constant 0 : i32
    %c0_i32_0 = arith.constant 0 : i32
    %c0_i32_1 = arith.constant 0 : i32
    return %c0_i32, %c0_i32_0 : i32, i32
  }
  func.func @transform_2(%arg0: i32, %arg1: i32) -> (i32, i32) {
    %c0_i32 = arith.constant 0 : i32
    %c0_i32_0 = arith.constant 0 : i32
    %c0_i32_1 = arith.constant 0 : i32
    return %c0_i32, %c0_i32_0 : i32, i32
  }
  func.func @transform_3(%arg0: i32, %arg1: i32) -> (i32, i32) {
    %c0_i32 = arith.constant 0 : i32
    %c0_i32_0 = arith.constant 0 : i32
    return %arg0, %c0_i32 : i32, i32
  }
}

</mosaic_0001>

<llo_original>
// kernel: tpu_custom_call.1
$region0: #{tpu_custom_call.1}
  #allocation0 [shape = 'u32[]', space=smem, size = 0x4, offset = 0x4, fixed_abs, tag = 'smem constant byte address 0x4 - core index']
  #allocation1 [shape = 'u32[144,128]{1,0:T(1,128)}', space=vmem, size = 0x12000, scoped, tag = 'internal scratch']
  #allocation2 [shape = 'f32[8,128]{1,0:T(8,128)}', space=vmem, size = 0x1000, scoped, tag = 'scratch operand']
  %s0 = inlined_call_operand.hbm [shape: f32[16,128], index: 0, kind: input, shape index: {}]
  %s1 = inlined_call_operand.hbm [shape: f32[128,128], index: 1, kind: input, shape index: {}]
  %s2 = inlined_call_operand.hbm [shape: f32[128,128], index: 2, kind: input, shape index: {}]
  %s3 = inlined_call_operand.hbm [shape: f32[16,128], index: 3, kind: output, shape index: {}]
  %s4 = sld [smem:[#allocation0]]
  $region65: #{tpu_custom_call.1} parent=0
    _
  %s6 = ssub.s32 1, %s4
  %s7 = scalar_select 0, %s6, %s4
  $region1: #{tpu_custom_call.1} parent=0
    #allocation3 [shape = 'u8[8192]{0}', space=vmem, size = 0x2000, scoped, tag = 'input window, operand 0']
    #allocation4 [shape = 's32[2]{0}', space=sflag, size = 0x8, scoped, tag = 'scoped memory for tpu_custom_call.1']
    #allocation5 [shape = 's32[2]{0}', space=sflag, size = 0x8, scoped, tag = 'scoped memory for tpu_custom_call.1']
    #allocation6 [shape = 'u8[65536]{0}', space=vmem, size = 0x10000, scoped, tag = 'input window, operand 1, single buffered']
    #allocation7 [shape = 's32[1]{0}', space=sflag, size = 0x4, scoped, tag = 'scoped memory for tpu_custom_call.1']
    #allocation8 [shape = 'u8[65536]{0}', space=vmem, size = 0x10000, scoped, tag = 'input window, operand 2, single buffered']
    #allocation9 [shape = 'u8[8192]{0}', space=vmem, size = 0x2000, scoped, tag = 'output window, operand 0']
    %8 = vsyncpa [#allocation4], 0
    %s9 = scalar_lea.sflag [#allocation4], 1
    %10 = vsyncpa %s9, 0
    %11 = vsyncpa [#allocation7], 0
    %12 = vsyncpa [#allocation5], 0
    %s13 = scalar_lea.sflag [#allocation5], 1
    %14 = vsyncpa %s13, 0
    loop: start=0, step=1, limit=4
    $region2: #{tpu_custom_call.1} parent=1 // loop_pre_header
      _
    $region3: #{tpu_custom_call.1} parent=1 // loop_header
      %s16 = sphi 0, %s20
      %p17 = scmp.ge.s32.totalorder %s16, 4
      %s23 = sphi 0, %s35
      %s24 = sphi 0, %s31
      %s25 = sphi 0, %s23
      %s26 = sphi 0, %s24
      %s27 = sphi 0, %s25
      %s28 = sphi 0, %s26
      %s38 = sphi 0, %s40
      %s41 = sphi 0, %s38
      %s42 = sphi 0, %s41
      %s58 = sphi 0, %s42
      %s62 = sphi 0, %s62
      %s64 = sphi 0, %s62
      %s65 = sphi 0, %s64
      %s79 = sphi 0, %s65
      %s83 = sphi 0, %s83
      %s85 = sphi 0, %s83
      %s86 = sphi 0, %s85
      %s100 = sphi 0, %s86
      %s106 = sphi 0, %s108
      %s109 = sphi 0, %s106
      %s110 = sphi 0, %s109
      %s126 = sphi 0, %s110
    $region4: #{tpu_custom_call.1} parent=1 // loop_header_branch
      %19 = sbr.rel (%p17) target = $region8
    $region5: #{tpu_custom_call.1} parent=1 // loop_body
      %s21 = ssub.s32 %s16, 1
      %s22 = ssub.s32 %s16, 2
      %s29 = sadd.s32 1, %s24
      %p30 = scmp.ge.s32.totalorder %s29, 1
      %s31 = scalar_select %p30, 0, %s29
      %s32 = sadd.s32 1, %s23
      %s33 = scalar_select %p30, %s32, %s23
      %p34 = scmp.ge.s32.totalorder %s33, 2
      %s35 = scalar_select %p34, 0, %s33
      %s36 = ssub.s32 %s23, %s35
      %p37 = scmp.eq.s32.totalorder %s36, 0
      %s39 = sadd.s32 %s38, 1
      %s40 = scalar_select %p37, %s38, %s39
      %p43 = pneg %p37
      %p44 = scmp.eq.s32.totalorder %s16, 1
      %p45 = por %p43, %p44
      %p46 = scmp.ne.s32.totalorder %s38, %s41
      %p47 = scmp.eq.s32.totalorder %s16, 0
      %p48 = por %p46, %p47
      %p49 = scmp.ne.s32.totalorder %s38, %s41
      %p50 = scmp.eq.s32.totalorder %s21, 1
      %p51 = por %p49, %p50
      %p52 = scmp.ne.s32.totalorder %s41, %s42
      %p53 = scmp.eq.s32.totalorder %s21, 0
      %p54 = por %p52, %p53
      %p55 = scmp.ne.s32.totalorder %s41, %s42
      %p56 = scmp.eq.s32.totalorder %s22, 1
      %p57 = por %p55, %p56
      %p59 = scmp.ne.s32.totalorder %s42, %s58
      %p60 = scmp.eq.s32.totalorder %s22, 0
      %p61 = por %p59, %p60
      %s63 = sadd.s32 %s62, 1
      %p66 = scmp.eq.s32.totalorder %s16, 1
      %p67 = scmp.ne.s32.totalorder %s62, %s64
      %p68 = scmp.eq.s32.totalorder %s16, 0
      %p69 = por %p67, %p68
      %p70 = scmp.ne.s32.totalorder %s62, %s64
      %p71 = scmp.eq.s32.totalorder %s21, 1
      %p72 = por %p70, %p71
      %p73 = scmp.ne.s32.totalorder %s64, %s65
      %p74 = scmp.eq.s32.totalorder %s21, 0
      %p75 = por %p73, %p74
      %p76 = scmp.ne.s32.totalorder %s64, %s65
      %p77 = scmp.eq.s32.totalorder %s22, 1
      %p78 = por %p76, %p77
      %p80 = scmp.ne.s32.totalorder %s65, %s79
      %p81 = scmp.eq.s32.totalorder %s22, 0
      %p82 = por %p80, %p81
      %s84 = sadd.s32 %s83, 1
      %p87 = scmp.eq.s32.totalorder %s16, 1
      %p88 = scmp.ne.s32.totalorder %s83, %s85
      %p89 = scmp.eq.s32.totalorder %s16, 0
      %p90 = por %p88, %p89
      %p91 = scmp.ne.s32.totalorder %s83, %s85
      %p92 = scmp.eq.s32.totalorder %s21, 1
      %p93 = por %p91, %p92
      %p94 = scmp.ne.s32.totalorder %s85, %s86
      %p95 = scmp.eq.s32.totalorder %s21, 0
      %p96 = por %p94, %p95
      %p97 = scmp.ne.s32.totalorder %s85, %s86
      %p98 = scmp.eq.s32.totalorder %s22, 1
      %p99 = por %p97, %p98
      %p101 = scmp.ne.s32.totalorder %s86, %s100
      %p102 = scmp.eq.s32.totalorder %s22, 0
      %p103 = por %p101, %p102
      %s104 = ssub.s32 %s23, %s35
      %p105 = scmp.eq.s32.totalorder %s104, 0
      %s107 = sadd.s32 %s106, 1
      %s108 = scalar_select %p105, %s106, %s107
      %p111 = pneg %p105
      %p112 = scmp.eq.s32.totalorder %s16, 1
      %p113 = por %p111, %p112
      %p114 = scmp.ne.s32.totalorder %s106, %s109
      %p115 = scmp.eq.s32.totalorder %s16, 0
      %p116 = por %p114, %p115
      %p117 = scmp.ne.s32.totalorder %s106, %s109
      %p118 = scmp.eq.s32.totalorder %s21, 1
      %p119 = por %p117, %p118
      %p120 = scmp.ne.s32.totalorder %s109, %s110
      %p121 = scmp.eq.s32.totalorder %s21, 0
      %p122 = por %p120, %p121
      %p123 = scmp.ne.s32.totalorder %s109, %s110
      %p124 = scmp.eq.s32.totalorder %s22, 1
      %p125 = por %p123, %p124
      %p127 = scmp.ne.s32.totalorder %s110, %s126
      %p128 = scmp.eq.s32.totalorder %s22, 0
      %p129 = por %p127, %p128
      %p130 = scmp.le.s32.totalorder 1, %s16
      %p131 = scmp.lt.s32.totalorder %s16, 3
      %p132 = pnand %p130, %p131
      %p133 = pneg %p132
      // Predicated region
      $region9: #{tpu_custom_call.1} parent=5 // pred_check
        _
      $region10: #{tpu_custom_call.1} parent=5 // pred_check_branch
        %135 = sbr.rel (%p132) target = $region12
      $region11: #{tpu_custom_call.1} parent=5 // pred_region
        %s136 = ssub.s32 %s16, 1
        // Predicated region
        $region13: #{tpu_custom_call.1} parent=11 // pred_check
          %p137 = pneg %p75
        $region14: #{tpu_custom_call.1} parent=11 // pred_check_branch
          %139 = sbr.rel (%p137) target = $region16
        $region15: #{tpu_custom_call.1} parent=11 // pred_region
          %s141 = ssub.s32 2048, 2048
          %142 = vsyncadd [#allocation7], %s141
          %s143 = sshll.u32 [#allocation6], 4
          %s144 = int_to_ptr.vmem [resolvable:$true] %s143
          %149 = dma.hbm_to_vmem [thread:$0]  %s1, 2048, %s144, [#allocation7], 128, 128, 8
        $region16: #{tpu_custom_call.1} parent=11 // pred_fallthru
          _
        // Predicated region
        $region17: #{tpu_custom_call.1} parent=11 // pred_check
          %p150 = pneg %p96
        $region18: #{tpu_custom_call.1} parent=11 // pred_check_branch
          %152 = sbr.rel (%p150) target = $region20
        $region19: #{tpu_custom_call.1} parent=11 // pred_region
          %s154 = ssub.s32 2048, 2048
          %155 = vsyncadd [#allocation7], %s154
          %s156 = sshll.u32 [#allocation8], 4
          %s157 = int_to_ptr.vmem [resolvable:$true] %s156
          %162 = dma.hbm_to_vmem [thread:$0]  %s2, 2048, %s157, [#allocation7], 128, 128, 8
        $region20: #{tpu_custom_call.1} parent=11 // pred_fallthru
          _
      $region12: #{tpu_custom_call.1} parent=5 // pred_fallthru
        _
      %p163 = scmp.lt.s32.totalorder %s16, 2
      // Predicated region
      $region21: #{tpu_custom_call.1} parent=5 // pred_check
        %p164 = pneg %p163
      $region22: #{tpu_custom_call.1} parent=5 // pred_check_branch
        %166 = sbr.rel (%p164) target = $region24
      $region23: #{tpu_custom_call.1} parent=5 // pred_region
        // Predicated region
        $region25: #{tpu_custom_call.1} parent=23 // pred_check
          %p167 = pneg %p48
        $region26: #{tpu_custom_call.1} parent=23 // pred_check_branch
          %169 = sbr.rel (%p167) target = $region28
        $region27: #{tpu_custom_call.1} parent=23 // pred_region
          %s170 = sand.u32 %s38, 1
          %s171 = scalar_lea.sflag [#allocation4], %s170
          %s172 = sand.u32 %s38, 1
          %s173 = smul.addr %s172, 8
          %s174 = scalar_lea.vmem [#allocation3], %s173
          %s176 = ssub.s32 128, 128
          %177 = vsyncadd %s171, %s176
          %s178 = smul.addr %s23, 128
          %s179 = scalar_lea.hbm %s0, %s178
          %s181 = sshll.u32 %s174, 4
          %s182 = int_to_ptr.vmem [resolvable:$true] %s181
          %184 = dma.hbm_to_vmem [thread:$0]  %s179, 128, %s182, %s171
        $region28: #{tpu_custom_call.1} parent=23 // pred_fallthru
          _
      $region24: #{tpu_custom_call.1} parent=5 // pred_fallthru
        _
      %p185 = scmp.le.s32.totalorder 1, %s16
      %p186 = scmp.lt.s32.totalorder %s16, 3
      %p187 = pnand %p185, %p186
      %p188 = pneg %p187
      // Predicated region
      $region29: #{tpu_custom_call.1} parent=5 // pred_check
        _
      $region30: #{tpu_custom_call.1} parent=5 // pred_check_branch
        %190 = sbr.rel (%p187) target = $region32
      $region31: #{tpu_custom_call.1} parent=5 // pred_region
        %s191 = ssub.s32 %s16, 1
        %s192 = sand.u32 %s41, 1
        %s193 = scalar_lea.sflag [#allocation4], %s192
        %s194 = sand.u32 %s41, 1
        %s195 = smul.addr %s194, 8
        %s196 = scalar_lea.vmem [#allocation3], %s195
        // Predicated region
        $region33: #{tpu_custom_call.1} parent=31 // pred_check
          %p197 = pneg %p54
        $region34: #{tpu_custom_call.1} parent=31 // pred_check_branch
          %199 = sbr.rel (%p197) target = $region36
        $region35: #{tpu_custom_call.1} parent=31 // pred_region
          %200 = dma.done %s193, 128
        $region36: #{tpu_custom_call.1} parent=31 // pred_fallthru
          _
        // Predicated region
        $region37: #{tpu_custom_call.1} parent=31 // pred_check
          %p201 = pneg %p75
        $region38: #{tpu_custom_call.1} parent=31 // pred_check_branch
          %203 = sbr.rel (%p201) target = $region40
        $region39: #{tpu_custom_call.1} parent=31 // pred_region
          %204 = dma.done [#allocation7], 2048
        $region40: #{tpu_custom_call.1} parent=31 // pred_fallthru
          _
        // Predicated region
        $region41: #{tpu_custom_call.1} parent=31 // pred_check
          %p205 = pneg %p96
        $region42: #{tpu_custom_call.1} parent=31 // pred_check_branch
          %207 = sbr.rel (%p205) target = $region44
        $region43: #{tpu_custom_call.1} parent=31 // pred_region
          %208 = dma.done [#allocation7], 2048
        $region44: #{tpu_custom_call.1} parent=31 // pred_fallthru
          _
        %s209 = sand.u32 %s41, 1
        %s210 = scalar_lea.sflag [#allocation4], %s209
        %s211 = sand.u32 %s41, 1
        %s212 = smul.addr %s211, 8
        %s213 = scalar_lea.vmem [#allocation3], %s212
        %p214 = pneg %p54
        %p215 = pneg %p51
        %p216 = pneg %p75
        %p217 = pneg %p72
        %p218 = pneg %p96
        %p219 = pneg %p93
        %p220 = pneg %p122
        %p221 = pneg %p119
        %s222 = sand.u32 %s109, 1
        %s223 = scalar_lea.sflag [#allocation5], %s222
        %s224 = sand.u32 %s109, 1
        %s225 = smul.addr %s224, 8
        %s226 = scalar_lea.vmem [#allocation9], %s225
        %p227 = scmp.eq.s32.totalorder %s26, 0
        // Predicated region
        $region45: #{tpu_custom_call.1} parent=31 // pred_check
          %p228 = pneg %p227
        $region46: #{tpu_custom_call.1} parent=31 // pred_check_branch
          %230 = sbr.rel (%p228) target = $region48
        $region47: #{tpu_custom_call.1} parent=31 // pred_region
          %v231 = vld [vmem:[%s196] sm:$0xff]
          %232 = vst [vmem:[#allocation2] sm:$0xff] %v231
        $region48: #{tpu_custom_call.1} parent=31 // pred_fallthru
          _
        %v233 = vld [vmem:[%s196] sm:$0xff]
        %v234 = vld [vmem:[#allocation6] sm:$0xff]
        %v235 = vld [vmem:[#allocation6 + $0x8] sm:$0xff]
        %v236 = vld [vmem:[#allocation6 + $0x10] sm:$0xff]
        %v237 = vld [vmem:[#allocation6 + $0x18] sm:$0xff]
        %v238 = vld [vmem:[#allocation6 + $0x20] sm:$0xff]
        %v239 = vld [vmem:[#allocation6 + $0x28] sm:$0xff]
        %v240 = vld [vmem:[#allocation6 + $0x30] sm:$0xff]
        %v241 = vld [vmem:[#allocation6 + $0x38] sm:$0xff]
        %v242 = vld [vmem:[#allocation6 + $0x40] sm:$0xff]
        %v243 = vld [vmem:[#allocation6 + $0x48] sm:$0xff]
        %v244 = vld [vmem:[#allocation6 + $0x50] sm:$0xff]
        %v245 = vld [vmem:[#allocation6 + $0x58] sm:$0xff]
        %v246 = vld [vmem:[#allocation6 + $0x60] sm:$0xff]
        %v247 = vld [vmem:[#allocation6 + $0x68] sm:$0xff]
        %v248 = vld [vmem:[#allocation6 + $0x70] sm:$0xff]
        %v249 = vld [vmem:[#allocation6 + $0x78] sm:$0xff]
        %250 = vmatprep.subr.mxu0 0.0
        %251 = vmatpush1.msra.mxu0 %v234
        %252 = vmatprep.subr.mxu0 0.0
        %253 = vmatpush1.msra.mxu0 %v235
        %254 = vmatprep.subr.mxu0 0.0
        %255 = vmatpush1.msra.mxu0 %v236
        %256 = vmatprep.subr.mxu0 0.0
        %257 = vmatpush1.msra.mxu0 %v237
        %258 = vmatprep.subr.mxu0 0.0
        %259 = vmatpush1.msra.mxu0 %v238
        %260 = vmatprep.subr.mxu0 0.0
        %261 = vmatpush1.msra.mxu0 %v239
        %262 = vmatprep.subr.mxu0 0.0
        %263 = vmatpush1.msra.mxu0 %v240
        %264 = vmatprep.subr.mxu0 0.0
        %265 = vmatpush1.msra.mxu0 %v241
        %266 = vmatprep.subr.mxu0 0.0
        %267 = vmatpush1.msra.mxu0 %v242
        %268 = vmatprep.subr.mxu0 0.0
        %269 = vmatpush1.msra.mxu0 %v243
        %270 = vmatprep.subr.mxu0 0.0
        %271 = vmatpush1.msra.mxu0 %v244
        %272 = vmatprep.subr.mxu0 0.0
        %273 = vmatpush1.msra.mxu0 %v245
        %274 = vmatprep.subr.mxu0 0.0
        %275 = vmatpush1.msra.mxu0 %v246
        %276 = vmatprep.subr.mxu0 0.0
        %277 = vmatpush1.msra.mxu0 %v247
        %278 = vmatprep.subr.mxu0 0.0
        %279 = vmatpush1.msra.mxu0 %v248
        %280 = vmatprep.subr.mxu0 0.0
        %281 = vmatpush1.msra.mxu0 %v249
        %282 = vmatprep.subr.mxu0 0.0
        %283 = vmatpush1.msra.mxu0 0.0
        %284 = vmatprep.subr.mxu0 0.0
        %285 = vmatpush1.msra.mxu0 0.0
        %286 = vmatprep.subr.mxu0 0.0
        %287 = vmatpush1.msra.mxu0 0.0
        %288 = vmatprep.subr.mxu0 0.0
        %289 = vmatpush1.msra.mxu0 0.0
        %290 = vmatprep.subr.mxu0 0.0
        %291 = vmatpush1.msra.mxu0 0.0
        %292 = vmatprep.subr.mxu0 0.0
        %293 = vmatpush1.msra.mxu0 0.0
        %294 = vmatprep.subr.mxu0 0.0
        %295 = vmatpush1.msra.mxu0 0.0
        %296 = vmatprep.subr.mxu0 0.0
        %297 = vmatpush1.msra.mxu0 0.0
        %298 = vmatprep.subr.mxu0 0.0
        %299 = vmatpush1.msra.mxu0 0.0
        %300 = vmatprep.subr.mxu0 0.0
        %301 = vmatpush1.msra.mxu0 0.0
        %302 = vmatprep.subr.mxu0 0.0
        %303 = vmatpush1.msra.mxu0 0.0
        %304 = vmatprep.subr.mxu0 0.0
        %305 = vmatpush1.msra.mxu0 0.0
        %306 = vmatprep.subr.mxu0 0.0
        %307 = vmatpush1.msra.mxu0 0.0
        %308 = vmatprep.subr.mxu0 0.0
        %309 = vmatpush1.msra.mxu0 0.0
        %310 = vmatprep.subr.mxu0 0.0
        %311 = vmatpush1.msra.mxu0 0.0
        %312 = vmatprep.subr.mxu0 0.0
        %313 = vmatpush1.msra.mxu0 0.0
        %314 = vmatprep.mubr.f32.mxu0 0.0
        %315 = vmatmul.mubr.f32.gmra.mrb[0].mxu0 %v233
        %v316 = vpop.f32.mrb[0].mxu0
        %v317 = vadd.f32 0.0, %v316
        %v318 = vpop.f32.mrb[0].mxu0
        %319 = vdwg.mxu0
        %v320 = vmax.f32 %v317, 0.0
        %v321 = vld [vmem:[#allocation2] sm:$0xff]
        %v322 = vld [vmem:[#allocation8] sm:$0xff]
        %v323 = vld [vmem:[#allocation8 + $0x8] sm:$0xff]
        %v324 = vld [vmem:[#allocation8 + $0x10] sm:$0xff]
        %v325 = vld [vmem:[#allocation8 + $0x18] sm:$0xff]
        %v326 = vld [vmem:[#allocation8 + $0x20] sm:$0xff]
        %v327 = vld [vmem:[#allocation8 + $0x28] sm:$0xff]
        %v328 = vld [vmem:[#allocation8 + $0x30] sm:$0xff]
        %v329 = vld [vmem:[#allocation8 + $0x38] sm:$0xff]
        %v330 = vld [vmem:[#allocation8 + $0x40] sm:$0xff]
        %v331 = vld [vmem:[#allocation8 + $0x48] sm:$0xff]
        %v332 = vld [vmem:[#allocation8 + $0x50] sm:$0xff]
        %v333 = vld [vmem:[#allocation8 + $0x58] sm:$0xff]
        %v334 = vld [vmem:[#allocation8 + $0x60] sm:$0xff]
        %v335 = vld [vmem:[#allocation8 + $0x68] sm:$0xff]
        %v336 = vld [vmem:[#allocation8 + $0x70] sm:$0xff]
        %v337 = vld [vmem:[#allocation8 + $0x78] sm:$0xff]
        %338 = vmatprep.subr.mxu0 0.0
        %339 = vmatpush1.msra.mxu0 %v322
        %340 = vmatprep.subr.mxu0 0.0
        %341 = vmatpush1.msra.mxu0 %v323
        %342 = vmatprep.subr.mxu0 0.0
        %343 = vmatpush1.msra.mxu0 %v324
        %344 = vmatprep.subr.mxu0 0.0
        %345 = vmatpush1.msra.mxu0 %v325
        %346 = vmatprep.subr.mxu0 0.0
        %347 = vmatpush1.msra.mxu0 %v326
        %348 = vmatprep.subr.mxu0 0.0
        %349 = vmatpush1.msra.mxu0 %v327
        %350 = vmatprep.subr.mxu0 0.0
        %351 = vmatpush1.msra.mxu0 %v328
        %352 = vmatprep.subr.mxu0 0.0
        %353 = vmatpush1.msra.mxu0 %v329
        %354 = vmatprep.subr.mxu0 0.0
        %355 = vmatpush1.msra.mxu0 %v330
        %356 = vmatprep.subr.mxu0 0.0
        %357 = vmatpush1.msra.mxu0 %v331
        %358 = vmatprep.subr.mxu0 0.0
        %359 = vmatpush1.msra.mxu0 %v332
        %360 = vmatprep.subr.mxu0 0.0
        %361 = vmatpush1.msra.mxu0 %v333
        %362 = vmatprep.subr.mxu0 0.0
        %363 = vmatpush1.msra.mxu0 %v334
        %364 = vmatprep.subr.mxu0 0.0
        %365 = vmatpush1.msra.mxu0 %v335
        %366 = vmatprep.subr.mxu0 0.0
        %367 = vmatpush1.msra.mxu0 %v336
        %368 = vmatprep.subr.mxu0 0.0
        %369 = vmatpush1.msra.mxu0 %v337
        %370 = vmatprep.subr.mxu0 0.0
        %371 = vmatpush1.msra.mxu0 0.0
        %372 = vmatprep.subr.mxu0 0.0
        %373 = vmatpush1.msra.mxu0 0.0
        %374 = vmatprep.subr.mxu0 0.0
        %375 = vmatpush1.msra.mxu0 0.0
        %376 = vmatprep.subr.mxu0 0.0
        %377 = vmatpush1.msra.mxu0 0.0
        %378 = vmatprep.subr.mxu0 0.0
        %379 = vmatpush1.msra.mxu0 0.0
        %380 = vmatprep.subr.mxu0 0.0
        %381 = vmatpush1.msra.mxu0 0.0
        %382 = vmatprep.subr.mxu0 0.0
        %383 = vmatpush1.msra.mxu0 0.0
        %384 = vmatprep.subr.mxu0 0.0
        %385 = vmatpush1.msra.mxu0 0.0
        %386 = vmatprep.subr.mxu0 0.0
        %387 = vmatpush1.msra.mxu0 0.0
        %388 = vmatprep.subr.mxu0 0.0
        %389 = vmatpush1.msra.mxu0 0.0
        %390 = vmatprep.subr.mxu0 0.0
        %391 = vmatpush1.msra.mxu0 0.0
        %392 = vmatprep.subr.mxu0 0.0
        %393 = vmatpush1.msra.mxu0 0.0
        %394 = vmatprep.subr.mxu0 0.0
        %395 = vmatpush1.msra.mxu0 0.0
        %396 = vmatprep.subr.mxu0 0.0
        %397 = vmatpush1.msra.mxu0 0.0
        %398 = vmatprep.subr.mxu0 0.0
        %399 = vmatpush1.msra.mxu0 0.0
        %400 = vmatprep.subr.mxu0 0.0
        %401 = vmatpush1.msra.mxu0 0.0
        %402 = vmatprep.mubr.f32.mxu0 0.0
        %403 = vmatmul.mubr.f32.gmra.mrb[0].mxu0 %v320
        %v404 = vpop.f32.mrb[0].mxu0
        %v405 = vadd.f32 0.0, %v404
        %v406 = vpop.f32.mrb[0].mxu0
        %407 = vdwg.mxu0
        %v408 = vadd.f32 %v321, %v405
        %409 = vst [vmem:[#allocation2] sm:$0xff] %v408
        // Predicated region
        $region49: #{tpu_custom_call.1} parent=31 // pred_check
          %p410 = pneg %p227
        $region50: #{tpu_custom_call.1} parent=31 // pred_check_branch
          %412 = sbr.rel (%p410) target = $region52
        $region51: #{tpu_custom_call.1} parent=31 // pred_region
          %v413 = vld [vmem:[#allocation2] sm:$0xff]
          %414 = vst [vmem:[%s226] sm:$0xff] %v413
        $region52: #{tpu_custom_call.1} parent=31 // pred_fallthru
          _
        %s415 = sand.u32 %s109, 1
        %s416 = scalar_lea.sflag [#allocation5], %s415
        %s417 = sand.u32 %s109, 1
        %s418 = smul.addr %s417, 8
        %s419 = scalar_lea.vmem [#allocation9], %s418
        // Predicated region
        $region53: #{tpu_custom_call.1} parent=31 // pred_check
          %p420 = pneg %p119
        $region54: #{tpu_custom_call.1} parent=31 // pred_check_branch
          %422 = sbr.rel (%p420) target = $region56
        $region55: #{tpu_custom_call.1} parent=31 // pred_region
          %s424 = ssub.s32 128, 128
          %425 = vsyncadd %s416, %s424
          %s426 = smul.addr %s25, 128
          %s427 = scalar_lea.hbm %s3, %s426
          %s429 = sshll.u32 %s419, 4
          %s430 = int_to_ptr.vmem [resolvable:$true] %s429
          %432 = dma.vmem_to_hbm [thread:$0]  %s430, 128, %s427, %s416
        $region56: #{tpu_custom_call.1} parent=31 // pred_fallthru
          _
      $region32: #{tpu_custom_call.1} parent=5 // pred_fallthru
        _
      %p433 = scmp.le.s32.totalorder 2, %s16
      // Predicated region
      $region57: #{tpu_custom_call.1} parent=5 // pred_check
        %p434 = pneg %p433
      $region58: #{tpu_custom_call.1} parent=5 // pred_check_branch
        %436 = sbr.rel (%p434) target = $region60
      $region59: #{tpu_custom_call.1} parent=5 // pred_region
        %s437 = ssub.s32 %s16, 2
        // Predicated region
        $region61: #{tpu_custom_call.1} parent=59 // pred_check
          %p438 = pneg %p125
        $region62: #{tpu_custom_call.1} parent=59 // pred_check_branch
          %440 = sbr.rel (%p438) target = $region64
        $region63: #{tpu_custom_call.1} parent=59 // pred_region
          %s441 = sand.u32 %s110, 1
          %s442 = scalar_lea.sflag [#allocation5], %s441
          %s443 = sand.u32 %s110, 1
          %s444 = smul.addr %s443, 8
          %s445 = scalar_lea.vmem [#allocation9], %s444
          %446 = dma.done %s442, 128
        $region64: #{tpu_custom_call.1} parent=59 // pred_fallthru
          _
      $region60: #{tpu_custom_call.1} parent=5 // pred_fallthru
        _
    $region6: #{tpu_custom_call.1} parent=1 // loop_footer
      %s20 = sadd.s32 1, %s16
    $region7: #{tpu_custom_call.1} parent=1 // loop_footer_branch
      %15 = sbr.rel target = $region3
    $region8: #{tpu_custom_call.1} parent=1 // loop_exit
      _
    %447 = vsyncpa [#allocation4], 1
    %s448 = scalar_lea.sflag [#allocation4], 1
    %449 = vsyncpa %s448, 1
    %450 = vsyncpa [#allocation7], 1
    %451 = vsyncpa [#allocation5], 1
    %s452 = scalar_lea.sflag [#allocation5], 1
    %453 = vsyncpa %s452, 1

</llo_original>
